<compile_context>
chip_gen: v7x
topology: tpu7x:2x2x1
jax: 0.10.0
libtpu: 0.0.40
codegen_flags: <defaults>
</compile_context>

<pallas_src>
import numpy as np
import jax
import jax.numpy as jnp
from jax.experimental import pallas as pl
from jax.experimental.pallas import tpu as pltpu


# ----------------------------- Pallas kernel ------------------------------ #
def _modnet_kernel(a_ref, bT_ref, y_ref, w2_ref, out_ref, acc_ref):
    """One (N-tile, Q-tile) grid step.

    a_ref   [tn, H]  : x @ W1a.T             (grid-invariant over the reduction axis)
    bT_ref  [H, tq]  : (quad_x @ W1b.T + b1).T  (Q-tiled; lane axis = quadrature)
    y_ref   [1, tq]  : quadrature weights for this tile
    w2_ref  [H]      : second-layer weights (SMEM scalars)
    out_ref [tn, 1]  : output block (resident across the reduction axis)
    acc_ref [tn, tq] : lane-dense f32 accumulator scratch
    """
    j = pl.program_id(1)

    @pl.when(j == 0)
    def _init():
        acc_ref[...] = jnp.zeros_like(acc_ref)

    a = a_ref[...]                                   # [tn, H]   (small, lane-padded)
    bT = bT_ref[...]                                 # [H, tq]   (lane-dense)
    y = y_ref[...]                                   # [1, tq]

    H = a.shape[-1]
    # Per-hidden-channel accumulation on lane-dense [tn, tq] tiles; the running
    # sum lives in registers and acc_ref is written once at the end of the step.
    s = jnp.zeros(acc_ref.shape, jnp.float32)        # [tn, tq]
    for h in range(H):                               # static, fully unrolled (H=32)
        z = a[:, h:h + 1] + bT[h:h + 1, :]           # [tn,1] + [1,tq] -> [tn, tq]
        # f32 tanh (EUP). bf16 tanh is an optional v6e/v7x lever (see header).
        s = s + w2_ref[h] * jnp.tanh(z)              # scalar (SMEM) * vreg FMA

    acc_ref[...] += s * y                            # quadrature weighting

    # Defer the width-1 store (and the lane reduction) to the last reduction step.
    @pl.when(j == pl.num_programs(1) - 1)
    def _finalize():
        out_ref[...] = jnp.sum(acc_ref[...], axis=-1, keepdims=True)   # [tn, 1]


# ------------------------------- wrapper ----------------------------------- #
def _pick_tile(dim, preferred, align):
    """Largest tile <= `preferred` that divides `dim` and is a multiple of
    `align`; falls back to the full dim (always legal for a BlockSpec)."""
    if dim <= preferred:
        return dim
    t = (preferred // align) * align
    while t >= align:
        if dim % t == 0:
            return t
        t -= align
    return dim


def modnet2_forward(x, quad_x, y, w1a, w1b, b1, w2, b2, *, tn=128, tq=128):
    N = x.shape[0]
    Q = quad_x.shape[0]
    H = w1a.shape[0]
    f32 = jnp.float32
    hi = jax.lax.Precision.HIGHEST

    # Hoisted (grid-invariant / tiny-K) first layer + b1, done once in plain XLA.
    a = jnp.dot(x.astype(f32), w1a.astype(f32).T, precision=hi)                  # [N, H]
    bT = (jnp.dot(quad_x.astype(f32), w1b.astype(f32).T, precision=hi)
          + b1.astype(f32)).T                                                    # [H, Q]
    y_row = y.reshape(1, Q).astype(f32)                                          # [1, Q]
    w2_vec = w2.reshape(H).astype(f32)                                           # [H]

    # Pad N (sublane axis) to a multiple of 8 and Q (lane axis) to a multiple
    # of 128.  Padded quadrature weights are zero -> contributions are exact.
    Np = max(8, ((N + 7) // 8) * 8)
    Qp = max(128, ((Q + 127) // 128) * 128)
    if Np != N:
        a = jnp.pad(a, ((0, Np - N), (0, 0)))
    if Qp != Q:
        bT = jnp.pad(bT, ((0, 0), (0, Qp - Q)))
        y_row = jnp.pad(y_row, ((0, 0), (0, Qp - Q)))

    tn = _pick_tile(Np, tn, 8)
    # v7x megacore: make sure the "parallel" axis has >= 2 tiles when possible.
    if Np // tn < 2:
        half = tn // 2
        if half >= 8 and half % 8 == 0 and Np % half == 0:
            tn = half
    tq = _pick_tile(Qp, tq, 128)

    # Advisory cost hint: the kernel is transcendental(EUP)-bound.
    cost = pl.CostEstimate(
        flops=int(3 * Np * Qp * H + 2 * Np * Qp),
        transcendentals=int(Np * Qp * H),
        bytes_accessed=int(4 * (Np * H + H * Qp + Qp + Np)),
    )

    partial = pl.pallas_call(
        _modnet_kernel,
        out_shape=jax.ShapeDtypeStruct((Np, 1), f32),
        grid_spec=pltpu.PrefetchScalarGridSpec(
            num_scalar_prefetch=0,
            grid=(Np // tn, Qp // tq),                            # reduction axis last
            in_specs=[
                pl.BlockSpec((tn, H), lambda i, j: (i, 0)),       # A tile (N-tiled)
                pl.BlockSpec((H, tq), lambda i, j: (0, j)),       # B^T tile (Q-tiled)
                pl.BlockSpec((1, tq), lambda i, j: (0, j)),       # y tile
                pl.BlockSpec(memory_space=pltpu.MemorySpace.SMEM),  # W2 scalars
            ],
            out_specs=pl.BlockSpec((tn, 1), lambda i, j: (i, 0)),
            scratch_shapes=[pltpu.VMEM((tn, tq), f32)],           # lane-dense accumulator
        ),
        compiler_params=pltpu.CompilerParams(
            dimension_semantics=("parallel", "arbitrary")),
        cost_estimate=cost,
    )(a, bT, y_row, w2_vec)

    out = partial[:N]
    # Hoisted b2 term: sum_j (s_ij + b2) * y_j = partial_i + b2 * sum_j y_j.
    return out + jnp.asarray(b2, f32).reshape(()) * jnp.sum(y.astype(f32))


# ------------------------- plain-JAX glue / reference ---------------------- #
def r_func(quad_x, eq_param):
    # Example r_func: scalar per quadrature point (shape [Q]).
    return jnp.sin(jnp.dot(quad_x, eq_param, precision=jax.lax.Precision.HIGHEST))


def modnet2_reference_np(x, quad_x, eq_param, w1, b1, w2, b2):
    # Literal translation of the PyTorch double loop (numpy, float64).
    x = np.asarray(x, np.float64)
    quad_x = np.asarray(quad_x, np.float64)
    eq_param = np.asarray(eq_param, np.float64)
    w1 = np.asarray(w1, np.float64)
    b1 = np.asarray(b1, np.float64)
    w2 = np.asarray(w2, np.float64)
    b2 = np.asarray(b2, np.float64)

    y = np.sin(quad_x @ eq_param)
    N, Q = x.shape[0], quad_x.shape[0]
    out = np.zeros((N, 1), np.float64)
    for i in range(N):
        for j in range(Q):
            z = np.concatenate([x[i, :], quad_x[j, :]], axis=0)
            h = np.tanh(z @ w1.T + b1)
            val = (h @ w2.T + b2).item()     # shape (1,) -> python float (NumPy 2 safe)
            out[i, 0] += val * y[j]
    return out


if __name__ == "__main__":
    # Small, deterministic shapes (Q=256 exercises lane-dense tq=128 tiling
    # and a 2-step reduction; N=16 -> tn=8 gives a 2-tile parallel axis).
    N, D_IN, Q, D_Q, H = 16, 4, 256, 4, 32

    key = jax.random.PRNGKey(0)
    kx, kq, ke, kw1, kb1, kw2, kb2 = jax.random.split(key, 7)
    x = jax.random.normal(kx, (N, D_IN), jnp.float32)
    quad_x = jax.random.normal(kq, (Q, D_Q), jnp.float32)
    eq_param = jax.random.normal(ke, (D_Q,), jnp.float32)

    # mlp_x parameters (Linear(D_IN+D_Q, H) -> tanh -> Linear(H, 1)).
    w1 = jax.random.normal(kw1, (H, D_IN + D_Q), jnp.float32) * 0.1
    b1 = jax.random.normal(kb1, (H,), jnp.float32) * 0.1
    w2 = jax.random.normal(kw2, (1, H), jnp.float32) * 0.1
    b2 = jax.random.normal(kb2, (1,), jnp.float32) * 0.1

    # Glue: quadrature weights + split of the first-layer weight over the concat.
    y = r_func(quad_x, eq_param)
    w1a, w1b = w1[:, :D_IN], w1[:, D_IN:]

    out = modnet2_forward(x, quad_x, y, w1a, w1b, b1, w2, b2)
    out = jax.block_until_ready(out)

    ref = modnet2_reference_np(x, quad_x, eq_param, w1, b1, w2, b2)
    assert out.shape == (N, 1)
    assert np.allclose(np.asarray(out), ref, atol=1e-4, rtol=1e-4), (
        float(np.abs(np.asarray(out) - ref).max()))

    print("KERNEL_OK")
</pallas_src>

<mosaic_0001>
module attributes {stable_mosaic.version = 11 : i64} {
  func.func @_modnet_kernel(%arg0: i32, %arg1: i32, %arg2: memref<8x32xf32, #tpu.memory_space<vmem>>, %arg3: memref<32x128xf32, #tpu.memory_space<vmem>>, %arg4: memref<1x128xf32, #tpu.memory_space<vmem>>, %arg5: memref<32xf32, #tpu.memory_space<smem>>, %arg6: memref<8x1xf32, #tpu.memory_space<vmem>>, %arg7: memref<8x128xf32, #tpu.memory_space<vmem>>) attributes {dimension_semantics = [#tpu.dimension_semantics<parallel>, #tpu.dimension_semantics<arbitrary>], iteration_bounds = array<i64: 2, 2>, scalar_prefetch = 0 : i64, scratch_operands = 1 : i64, tpu.core_type = #tpu.core_type<tc>, window_params = [{transform_indices = @transform_0, window_bounds = array<i64: 8, 32>}, {transform_indices = @transform_1, window_bounds = array<i64: 32, 128>}, {transform_indices = @transform_2, window_bounds = array<i64: 1, 128>}, {transform_indices = @transform_3, window_bounds = array<i64: 32>}, {transform_indices = @transform_4, window_bounds = array<i64: 8, 1>}]} {
    %c0_i32 = arith.constant 0 : i32
    %0 = arith.cmpi eq, %arg1, %c0_i32 : i32
    %1 = arith.extui %0 : i1 to i32
    %c0_i32_0 = arith.constant 0 : i32
    %2 = arith.cmpi ne, %1, %c0_i32_0 : i32
    scf.if %2 {
      %cst_12 = arith.constant 0.000000e+00 : f32
      %335 = vector.broadcast %cst_12 : f32 to vector<8x128xf32>
      %c0_13 = arith.constant 0 : index
      %c0_14 = arith.constant 0 : index
      %336 = vector.load %arg7[%c0_13, %c0_14] : memref<8x128xf32, #tpu.memory_space<vmem>>, vector<8x128xf32>
      tpu.vector_store %arg7[%c0_13, %c0_14], %335 {strides = array<i32>} : memref<8x128xf32, #tpu.memory_space<vmem>>, vector<8x128xf32>,
    } else {
    }
    %c0 = arith.constant 0 : index
    %c0_1 = arith.constant 0 : index
    %3 = vector.load %arg2[%c0, %c0_1] : memref<8x32xf32, #tpu.memory_space<vmem>>, vector<8x32xf32>
    %c0_2 = arith.constant 0 : index
    %c0_3 = arith.constant 0 : index
    %4 = vector.load %arg3[%c0_2, %c0_3] : memref<32x128xf32, #tpu.memory_space<vmem>>, vector<32x128xf32>
    %c0_4 = arith.constant 0 : index
    %c0_5 = arith.constant 0 : index
    %5 = vector.load %arg4[%c0_4, %c0_5] : memref<1x128xf32, #tpu.memory_space<vmem>>, vector<1x128xf32>
    %cst = arith.constant 0.000000e+00 : f32
    %6 = vector.broadcast %cst : f32 to vector<8x128xf32>
    %7 = vector.extract_strided_slice %3 {offsets = [0, 0], sizes = [8, 1], strides = [1, 1]} : vector<8x32xf32> to vector<8x1xf32>
    %8 = vector.extract_strided_slice %4 {offsets = [0, 0], sizes = [1, 128], strides = [1, 1]} : vector<32x128xf32> to vector<1x128xf32>
    %9 = vector.broadcast %7 : vector<8x1xf32> to vector<8x128xf32>
    %10 = vector.broadcast %8 : vector<1x128xf32> to vector<8x128xf32>
    %11 = arith.addf %9, %10 : vector<8x128xf32>
    %c0_6 = arith.constant 0 : index
    %12 = memref.load %arg5[%c0_6] : memref<32xf32, #tpu.memory_space<smem>>
    %13 = math.tanh %11 : vector<8x128xf32>
    %14 = vector.broadcast %12 : f32 to vector<8x128xf32>
    %15 = arith.mulf %14, %13 : vector<8x128xf32>
    %16 = arith.addf %6, %15 : vector<8x128xf32>
    %17 = vector.extract_strided_slice %3 {offsets = [0, 1], sizes = [8, 1], strides = [1, 1]} : vector<8x32xf32> to vector<8x1xf32>
    %18 = vector.extract_strided_slice %4 {offsets = [1, 0], sizes = [1, 128], strides = [1, 1]} : vector<32x128xf32> to vector<1x128xf32>
    %19 = vector.broadcast %17 : vector<8x1xf32> to vector<8x128xf32>
    %20 = vector.broadcast %18 : vector<1x128xf32> to vector<8x128xf32>
    %21 = arith.addf %19, %20 : vector<8x128xf32>
    %c1 = arith.constant 1 : index
    %22 = memref.load %arg5[%c1] : memref<32xf32, #tpu.memory_space<smem>>
    %23 = math.tanh %21 : vector<8x128xf32>
    %24 = vector.broadcast %22 : f32 to vector<8x128xf32>
    %25 = arith.mulf %24, %23 : vector<8x128xf32>
    %26 = arith.addf %16, %25 : vector<8x128xf32>
    %27 = vector.extract_strided_slice %3 {offsets = [0, 2], sizes = [8, 1], strides = [1, 1]} : vector<8x32xf32> to vector<8x1xf32>
    %28 = vector.extract_strided_slice %4 {offsets = [2, 0], sizes = [1, 128], strides = [1, 1]} : vector<32x128xf32> to vector<1x128xf32>
    %29 = vector.broadcast %27 : vector<8x1xf32> to vector<8x128xf32>
    %30 = vector.broadcast %28 : vector<1x128xf32> to vector<8x128xf32>
    %31 = arith.addf %29, %30 : vector<8x128xf32>
    %c2 = arith.constant 2 : index
    %32 = memref.load %arg5[%c2] : memref<32xf32, #tpu.memory_space<smem>>
    %33 = math.tanh %31 : vector<8x128xf32>
    %34 = vector.broadcast %32 : f32 to vector<8x128xf32>
    %35 = arith.mulf %34, %33 : vector<8x128xf32>
    %36 = arith.addf %26, %35 : vector<8x128xf32>
    %37 = vector.extract_strided_slice %3 {offsets = [0, 3], sizes = [8, 1], strides = [1, 1]} : vector<8x32xf32> to vector<8x1xf32>
    %38 = vector.extract_strided_slice %4 {offsets = [3, 0], sizes = [1, 128], strides = [1, 1]} : vector<32x128xf32> to vector<1x128xf32>
    %39 = vector.broadcast %37 : vector<8x1xf32> to vector<8x128xf32>
    %40 = vector.broadcast %38 : vector<1x128xf32> to vector<8x128xf32>
    %41 = arith.addf %39, %40 : vector<8x128xf32>
    %c3 = arith.constant 3 : index
    %42 = memref.load %arg5[%c3] : memref<32xf32, #tpu.memory_space<smem>>
    %43 = math.tanh %41 : vector<8x128xf32>
    %44 = vector.broadcast %42 : f32 to vector<8x128xf32>
    %45 = arith.mulf %44, %43 : vector<8x128xf32>
    %46 = arith.addf %36, %45 : vector<8x128xf32>
    %47 = vector.extract_strided_slice %3 {offsets = [0, 4], sizes = [8, 1], strides = [1, 1]} : vector<8x32xf32> to vector<8x1xf32>
    %48 = vector.extract_strided_slice %4 {offsets = [4, 0], sizes = [1, 128], strides = [1, 1]} : vector<32x128xf32> to vector<1x128xf32>
    %49 = vector.broadcast %47 : vector<8x1xf32> to vector<8x128xf32>
    %50 = vector.broadcast %48 : vector<1x128xf32> to vector<8x128xf32>
    %51 = arith.addf %49, %50 : vector<8x128xf32>
    %c4 = arith.constant 4 : index
    %52 = memref.load %arg5[%c4] : memref<32xf32, #tpu.memory_space<smem>>
    %53 = math.tanh %51 : vector<8x128xf32>
    %54 = vector.broadcast %52 : f32 to vector<8x128xf32>
    %55 = arith.mulf %54, %53 : vector<8x128xf32>
    %56 = arith.addf %46, %55 : vector<8x128xf32>
    %57 = vector.extract_strided_slice %3 {offsets = [0, 5], sizes = [8, 1], strides = [1, 1]} : vector<8x32xf32> to vector<8x1xf32>
    %58 = vector.extract_strided_slice %4 {offsets = [5, 0], sizes = [1, 128], strides = [1, 1]} : vector<32x128xf32> to vector<1x128xf32>
    %59 = vector.broadcast %57 : vector<8x1xf32> to vector<8x128xf32>
    %60 = vector.broadcast %58 : vector<1x128xf32> to vector<8x128xf32>
    %61 = arith.addf %59, %60 : vector<8x128xf32>
    %c5 = arith.constant 5 : index
    %62 = memref.load %arg5[%c5] : memref<32xf32, #tpu.memory_space<smem>>
    %63 = math.tanh %61 : vector<8x128xf32>
    %64 = vector.broadcast %62 : f32 to vector<8x128xf32>
    %65 = arith.mulf %64, %63 : vector<8x128xf32>
    %66 = arith.addf %56, %65 : vector<8x128xf32>
    %67 = vector.extract_strided_slice %3 {offsets = [0, 6], sizes = [8, 1], strides = [1, 1]} : vector<8x32xf32> to vector<8x1xf32>
    %68 = vector.extract_strided_slice %4 {offsets = [6, 0], sizes = [1, 128], strides = [1, 1]} : vector<32x128xf32> to vector<1x128xf32>
    %69 = vector.broadcast %67 : vector<8x1xf32> to vector<8x128xf32>
    %70 = vector.broadcast %68 : vector<1x128xf32> to vector<8x128xf32>
    %71 = arith.addf %69, %70 : vector<8x128xf32>
    %c6 = arith.constant 6 : index
    %72 = memref.load %arg5[%c6] : memref<32xf32, #tpu.memory_space<smem>>
    %73 = math.tanh %71 : vector<8x128xf32>
    %74 = vector.broadcast %72 : f32 to vector<8x128xf32>
    %75 = arith.mulf %74, %73 : vector<8x128xf32>
    %76 = arith.addf %66, %75 : vector<8x128xf32>
    %77 = vector.extract_strided_slice %3 {offsets = [0, 7], sizes = [8, 1], strides = [1, 1]} : vector<8x32xf32> to vector<8x1xf32>
    %78 = vector.extract_strided_slice %4 {offsets = [7, 0], sizes = [1, 128], strides = [1, 1]} : vector<32x128xf32> to vector<1x128xf32>
    %79 = vector.broadcast %77 : vector<8x1xf32> to vector<8x128xf32>
    %80 = vector.broadcast %78 : vector<1x128xf32> to vector<8x128xf32>
    %81 = arith.addf %79, %80 : vector<8x128xf32>
    %c7 = arith.constant 7 : index
    %82 = memref.load %arg5[%c7] : memref<32xf32, #tpu.memory_space<smem>>
    %83 = math.tanh %81 : vector<8x128xf32>
    %84 = vector.broadcast %82 : f32 to vector<8x128xf32>
    %85 = arith.mulf %84, %83 : vector<8x128xf32>
    %86 = arith.addf %76, %85 : vector<8x128xf32>
    %87 = vector.extract_strided_slice %3 {offsets = [0, 8], sizes = [8, 1], strides = [1, 1]} : vector<8x32xf32> to vector<8x1xf32>
    %88 = vector.extract_strided_slice %4 {offsets = [8, 0], sizes = [1, 128], strides = [1, 1]} : vector<32x128xf32> to vector<1x128xf32>
    %89 = vector.broadcast %87 : vector<8x1xf32> to vector<8x128xf32>
    %90 = vector.broadcast %88 : vector<1x128xf32> to vector<8x128xf32>
    %91 = arith.addf %89, %90 : vector<8x128xf32>
    %c8 = arith.constant 8 : index
    %92 = memref.load %arg5[%c8] : memref<32xf32, #tpu.memory_space<smem>>
    %93 = math.tanh %91 : vector<8x128xf32>
    %94 = vector.broadcast %92 : f32 to vector<8x128xf32>
    %95 = arith.mulf %94, %93 : vector<8x128xf32>
    %96 = arith.addf %86, %95 : vector<8x128xf32>
    %97 = vector.extract_strided_slice %3 {offsets = [0, 9], sizes = [8, 1], strides = [1, 1]} : vector<8x32xf32> to vector<8x1xf32>
    %98 = vector.extract_strided_slice %4 {offsets = [9, 0], sizes = [1, 128], strides = [1, 1]} : vector<32x128xf32> to vector<1x128xf32>
    %99 = vector.broadcast %97 : vector<8x1xf32> to vector<8x128xf32>
    %100 = vector.broadcast %98 : vector<1x128xf32> to vector<8x128xf32>
    %101 = arith.addf %99, %100 : vector<8x128xf32>
    %c9 = arith.constant 9 : index
    %102 = memref.load %arg5[%c9] : memref<32xf32, #tpu.memory_space<smem>>
    %103 = math.tanh %101 : vector<8x128xf32>
    %104 = vector.broadcast %102 : f32 to vector<8x128xf32>
    %105 = arith.mulf %104, %103 : vector<8x128xf32>
    %106 = arith.addf %96, %105 : vector<8x128xf32>
    %107 = vector.extract_strided_slice %3 {offsets = [0, 10], sizes = [8, 1], strides = [1, 1]} : vector<8x32xf32> to vector<8x1xf32>
    %108 = vector.extract_strided_slice %4 {offsets = [10, 0], sizes = [1, 128], strides = [1, 1]} : vector<32x128xf32> to vector<1x128xf32>
    %109 = vector.broadcast %107 : vector<8x1xf32> to vector<8x128xf32>
    %110 = vector.broadcast %108 : vector<1x128xf32> to vector<8x128xf32>
    %111 = arith.addf %109, %110 : vector<8x128xf32>
    %c10 = arith.constant 10 : index
    %112 = memref.load %arg5[%c10] : memref<32xf32, #tpu.memory_space<smem>>
    %113 = math.tanh %111 : vector<8x128xf32>
    %114 = vector.broadcast %112 : f32 to vector<8x128xf32>
    %115 = arith.mulf %114, %113 : vector<8x128xf32>
    %116 = arith.addf %106, %115 : vector<8x128xf32>
    %117 = vector.extract_strided_slice %3 {offsets = [0, 11], sizes = [8, 1], strides = [1, 1]} : vector<8x32xf32> to vector<8x1xf32>
    %118 = vector.extract_strided_slice %4 {offsets = [11, 0], sizes = [1, 128], strides = [1, 1]} : vector<32x128xf32> to vector<1x128xf32>
    %119 = vector.broadcast %117 : vector<8x1xf32> to vector<8x128xf32>
    %120 = vector.broadcast %118 : vector<1x128xf32> to vector<8x128xf32>
    %121 = arith.addf %119, %120 : vector<8x128xf32>
    %c11 = arith.constant 11 : index
    %122 = memref.load %arg5[%c11] : memref<32xf32, #tpu.memory_space<smem>>
    %123 = math.tanh %121 : vector<8x128xf32>
    %124 = vector.broadcast %122 : f32 to vector<8x128xf32>
    %125 = arith.mulf %124, %123 : vector<8x128xf32>
    %126 = arith.addf %116, %125 : vector<8x128xf32>
    %127 = vector.extract_strided_slice %3 {offsets = [0, 12], sizes = [8, 1], strides = [1, 1]} : vector<8x32xf32> to vector<8x1xf32>
    %128 = vector.extract_strided_slice %4 {offsets = [12, 0], sizes = [1, 128], strides = [1, 1]} : vector<32x128xf32> to vector<1x128xf32>
    %129 = vector.broadcast %127 : vector<8x1xf32> to vector<8x128xf32>
    %130 = vector.broadcast %128 : vector<1x128xf32> to vector<8x128xf32>
    %131 = arith.addf %129, %130 : vector<8x128xf32>
    %c12 = arith.constant 12 : index
    %132 = memref.load %arg5[%c12] : memref<32xf32, #tpu.memory_space<smem>>
    %133 = math.tanh %131 : vector<8x128xf32>
    %134 = vector.broadcast %132 : f32 to vector<8x128xf32>
    %135 = arith.mulf %134, %133 : vector<8x128xf32>
    %136 = arith.addf %126, %135 : vector<8x128xf32>
    %137 = vector.extract_strided_slice %3 {offsets = [0, 13], sizes = [8, 1], strides = [1, 1]} : vector<8x32xf32> to vector<8x1xf32>
    %138 = vector.extract_strided_slice %4 {offsets = [13, 0], sizes = [1, 128], strides = [1, 1]} : vector<32x128xf32> to vector<1x128xf32>
    %139 = vector.broadcast %137 : vector<8x1xf32> to vector<8x128xf32>
    %140 = vector.broadcast %138 : vector<1x128xf32> to vector<8x128xf32>
    %141 = arith.addf %139, %140 : vector<8x128xf32>
    %c13 = arith.constant 13 : index
    %142 = memref.load %arg5[%c13] : memref<32xf32, #tpu.memory_space<smem>>
    %143 = math.tanh %141 : vector<8x128xf32>
    %144 = vector.broadcast %142 : f32 to vector<8x128xf32>
    %145 = arith.mulf %144, %143 : vector<8x128xf32>
    %146 = arith.addf %136, %145 : vector<8x128xf32>
    %147 = vector.extract_strided_slice %3 {offsets = [0, 14], sizes = [8, 1], strides = [1, 1]} : vector<8x32xf32> to vector<8x1xf32>
    %148 = vector.extract_strided_slice %4 {offsets = [14, 0], sizes = [1, 128], strides = [1, 1]} : vector<32x128xf32> to vector<1x128xf32>
    %149 = vector.broadcast %147 : vector<8x1xf32> to vector<8x128xf32>
    %150 = vector.broadcast %148 : vector<1x128xf32> to vector<8x128xf32>
    %151 = arith.addf %149, %150 : vector<8x128xf32>
    %c14 = arith.constant 14 : index
    %152 = memref.load %arg5[%c14] : memref<32xf32, #tpu.memory_space<smem>>
    %153 = math.tanh %151 : vector<8x128xf32>
    %154 = vector.broadcast %152 : f32 to vector<8x128xf32>
    %155 = arith.mulf %154, %153 : vector<8x128xf32>
    %156 = arith.addf %146, %155 : vector<8x128xf32>
    %157 = vector.extract_strided_slice %3 {offsets = [0, 15], sizes = [8, 1], strides = [1, 1]} : vector<8x32xf32> to vector<8x1xf32>
    %158 = vector.extract_strided_slice %4 {offsets = [15, 0], sizes = [1, 128], strides = [1, 1]} : vector<32x128xf32> to vector<1x128xf32>
    %159 = vector.broadcast %157 : vector<8x1xf32> to vector<8x128xf32>
    %160 = vector.broadcast %158 : vector<1x128xf32> to vector<8x128xf32>
    %161 = arith.addf %159, %160 : vector<8x128xf32>
    %c15 = arith.constant 15 : index
    %162 = memref.load %arg5[%c15] : memref<32xf32, #tpu.memory_space<smem>>
    %163 = math.tanh %161 : vector<8x128xf32>
    %164 = vector.broadcast %162 : f32 to vector<8x128xf32>
    %165 = arith.mulf %164, %163 : vector<8x128xf32>
    %166 = arith.addf %156, %165 : vector<8x128xf32>
    %167 = vector.extract_strided_slice %3 {offsets = [0, 16], sizes = [8, 1], strides = [1, 1]} : vector<8x32xf32> to vector<8x1xf32>
    %168 = vector.extract_strided_slice %4 {offsets = [16, 0], sizes = [1, 128], strides = [1, 1]} : vector<32x128xf32> to vector<1x128xf32>
    %169 = vector.broadcast %167 : vector<8x1xf32> to vector<8x128xf32>
    %170 = vector.broadcast %168 : vector<1x128xf32> to vector<8x128xf32>
    %171 = arith.addf %169, %170 : vector<8x128xf32>
    %c16 = arith.constant 16 : index
    %172 = memref.load %arg5[%c16] : memref<32xf32, #tpu.memory_space<smem>>
    %173 = math.tanh %171 : vector<8x128xf32>
    %174 = vector.broadcast %172 : f32 to vector<8x128xf32>
    %175 = arith.mulf %174, %173 : vector<8x128xf32>
    %176 = arith.addf %166, %175 : vector<8x128xf32>
    %177 = vector.extract_strided_slice %3 {offsets = [0, 17], sizes = [8, 1], strides = [1, 1]} : vector<8x32xf32> to vector<8x1xf32>
    %178 = vector.extract_strided_slice %4 {offsets = [17, 0], sizes = [1, 128], strides = [1, 1]} : vector<32x128xf32> to vector<1x128xf32>
    %179 = vector.broadcast %177 : vector<8x1xf32> to vector<8x128xf32>
    %180 = vector.broadcast %178 : vector<1x128xf32> to vector<8x128xf32>
    %181 = arith.addf %179, %180 : vector<8x128xf32>
    %c17 = arith.constant 17 : index
    %182 = memref.load %arg5[%c17] : memref<32xf32, #tpu.memory_space<smem>>
    %183 = math.tanh %181 : vector<8x128xf32>
    %184 = vector.broadcast %182 : f32 to vector<8x128xf32>
    %185 = arith.mulf %184, %183 : vector<8x128xf32>
    %186 = arith.addf %176, %185 : vector<8x128xf32>
    %187 = vector.extract_strided_slice %3 {offsets = [0, 18], sizes = [8, 1], strides = [1, 1]} : vector<8x32xf32> to vector<8x1xf32>
    %188 = vector.extract_strided_slice %4 {offsets = [18, 0], sizes = [1, 128], strides = [1, 1]} : vector<32x128xf32> to vector<1x128xf32>
    %189 = vector.broadcast %187 : vector<8x1xf32> to vector<8x128xf32>
    %190 = vector.broadcast %188 : vector<1x128xf32> to vector<8x128xf32>
    %191 = arith.addf %189, %190 : vector<8x128xf32>
    %c18 = arith.constant 18 : index
    %192 = memref.load %arg5[%c18] : memref<32xf32, #tpu.memory_space<smem>>
    %193 = math.tanh %191 : vector<8x128xf32>
    %194 = vector.broadcast %192 : f32 to vector<8x128xf32>
    %195 = arith.mulf %194, %193 : vector<8x128xf32>
    %196 = arith.addf %186, %195 : vector<8x128xf32>
    %197 = vector.extract_strided_slice %3 {offsets = [0, 19], sizes = [8, 1], strides = [1, 1]} : vector<8x32xf32> to vector<8x1xf32>
    %198 = vector.extract_strided_slice %4 {offsets = [19, 0], sizes = [1, 128], strides = [1, 1]} : vector<32x128xf32> to vector<1x128xf32>
    %199 = vector.broadcast %197 : vector<8x1xf32> to vector<8x128xf32>
    %200 = vector.broadcast %198 : vector<1x128xf32> to vector<8x128xf32>
    %201 = arith.addf %199, %200 : vector<8x128xf32>
    %c19 = arith.constant 19 : index
    %202 = memref.load %arg5[%c19] : memref<32xf32, #tpu.memory_space<smem>>
    %203 = math.tanh %201 : vector<8x128xf32>
    %204 = vector.broadcast %202 : f32 to vector<8x128xf32>
    %205 = arith.mulf %204, %203 : vector<8x128xf32>
    %206 = arith.addf %196, %205 : vector<8x128xf32>
    %207 = vector.extract_strided_slice %3 {offsets = [0, 20], sizes = [8, 1], strides = [1, 1]} : vector<8x32xf32> to vector<8x1xf32>
    %208 = vector.extract_strided_slice %4 {offsets = [20, 0], sizes = [1, 128], strides = [1, 1]} : vector<32x128xf32> to vector<1x128xf32>
    %209 = vector.broadcast %207 : vector<8x1xf32> to vector<8x128xf32>
    %210 = vector.broadcast %208 : vector<1x128xf32> to vector<8x128xf32>
    %211 = arith.addf %209, %210 : vector<8x128xf32>
    %c20 = arith.constant 20 : index
    %212 = memref.load %arg5[%c20] : memref<32xf32, #tpu.memory_space<smem>>
    %213 = math.tanh %211 : vector<8x128xf32>
    %214 = vector.broadcast %212 : f32 to vector<8x128xf32>
    %215 = arith.mulf %214, %213 : vector<8x128xf32>
    %216 = arith.addf %206, %215 : vector<8x128xf32>
    %217 = vector.extract_strided_slice %3 {offsets = [0, 21], sizes = [8, 1], strides = [1, 1]} : vector<8x32xf32> to vector<8x1xf32>
    %218 = vector.extract_strided_slice %4 {offsets = [21, 0], sizes = [1, 128], strides = [1, 1]} : vector<32x128xf32> to vector<1x128xf32>
    %219 = vector.broadcast %217 : vector<8x1xf32> to vector<8x128xf32>
    %220 = vector.broadcast %218 : vector<1x128xf32> to vector<8x128xf32>
    %221 = arith.addf %219, %220 : vector<8x128xf32>
    %c21 = arith.constant 21 : index
    %222 = memref.load %arg5[%c21] : memref<32xf32, #tpu.memory_space<smem>>
    %223 = math.tanh %221 : vector<8x128xf32>
    %224 = vector.broadcast %222 : f32 to vector<8x128xf32>
    %225 = arith.mulf %224, %223 : vector<8x128xf32>
    %226 = arith.addf %216, %225 : vector<8x128xf32>
    %227 = vector.extract_strided_slice %3 {offsets = [0, 22], sizes = [8, 1], strides = [1, 1]} : vector<8x32xf32> to vector<8x1xf32>
    %228 = vector.extract_strided_slice %4 {offsets = [22, 0], sizes = [1, 128], strides = [1, 1]} : vector<32x128xf32> to vector<1x128xf32>
    %229 = vector.broadcast %227 : vector<8x1xf32> to vector<8x128xf32>
    %230 = vector.broadcast %228 : vector<1x128xf32> to vector<8x128xf32>
    %231 = arith.addf %229, %230 : vector<8x128xf32>
    %c22 = arith.constant 22 : index
    %232 = memref.load %arg5[%c22] : memref<32xf32, #tpu.memory_space<smem>>
    %233 = math.tanh %231 : vector<8x128xf32>
    %234 = vector.broadcast %232 : f32 to vector<8x128xf32>
    %235 = arith.mulf %234, %233 : vector<8x128xf32>
    %236 = arith.addf %226, %235 : vector<8x128xf32>
    %237 = vector.extract_strided_slice %3 {offsets = [0, 23], sizes = [8, 1], strides = [1, 1]} : vector<8x32xf32> to vector<8x1xf32>
    %238 = vector.extract_strided_slice %4 {offsets = [23, 0], sizes = [1, 128], strides = [1, 1]} : vector<32x128xf32> to vector<1x128xf32>
    %239 = vector.broadcast %237 : vector<8x1xf32> to vector<8x128xf32>
    %240 = vector.broadcast %238 : vector<1x128xf32> to vector<8x128xf32>
    %241 = arith.addf %239, %240 : vector<8x128xf32>
    %c23 = arith.constant 23 : index
    %242 = memref.load %arg5[%c23] : memref<32xf32, #tpu.memory_space<smem>>
    %243 = math.tanh %241 : vector<8x128xf32>
    %244 = vector.broadcast %242 : f32 to vector<8x128xf32>
    %245 = arith.mulf %244, %243 : vector<8x128xf32>
    %246 = arith.addf %236, %245 : vector<8x128xf32>
    %247 = vector.extract_strided_slice %3 {offsets = [0, 24], sizes = [8, 1], strides = [1, 1]} : vector<8x32xf32> to vector<8x1xf32>
    %248 = vector.extract_strided_slice %4 {offsets = [24, 0], sizes = [1, 128], strides = [1, 1]} : vector<32x128xf32> to vector<1x128xf32>
    %249 = vector.broadcast %247 : vector<8x1xf32> to vector<8x128xf32>
    %250 = vector.broadcast %248 : vector<1x128xf32> to vector<8x128xf32>
    %251 = arith.addf %249, %250 : vector<8x128xf32>
    %c24 = arith.constant 24 : index
    %252 = memref.load %arg5[%c24] : memref<32xf32, #tpu.memory_space<smem>>
    %253 = math.tanh %251 : vector<8x128xf32>
    %254 = vector.broadcast %252 : f32 to vector<8x128xf32>
    %255 = arith.mulf %254, %253 : vector<8x128xf32>
    %256 = arith.addf %246, %255 : vector<8x128xf32>
    %257 = vector.extract_strided_slice %3 {offsets = [0, 25], sizes = [8, 1], strides = [1, 1]} : vector<8x32xf32> to vector<8x1xf32>
    %258 = vector.extract_strided_slice %4 {offsets = [25, 0], sizes = [1, 128], strides = [1, 1]} : vector<32x128xf32> to vector<1x128xf32>
    %259 = vector.broadcast %257 : vector<8x1xf32> to vector<8x128xf32>
    %260 = vector.broadcast %258 : vector<1x128xf32> to vector<8x128xf32>
    %261 = arith.addf %259, %260 : vector<8x128xf32>
    %c25 = arith.constant 25 : index
    %262 = memref.load %arg5[%c25] : memref<32xf32, #tpu.memory_space<smem>>
    %263 = math.tanh %261 : vector<8x128xf32>
    %264 = vector.broadcast %262 : f32 to vector<8x128xf32>
    %265 = arith.mulf %264, %263 : vector<8x128xf32>
    %266 = arith.addf %256, %265 : vector<8x128xf32>
    %267 = vector.extract_strided_slice %3 {offsets = [0, 26], sizes = [8, 1], strides = [1, 1]} : vector<8x32xf32> to vector<8x1xf32>
    %268 = vector.extract_strided_slice %4 {offsets = [26, 0], sizes = [1, 128], strides = [1, 1]} : vector<32x128xf32> to vector<1x128xf32>
    %269 = vector.broadcast %267 : vector<8x1xf32> to vector<8x128xf32>
    %270 = vector.broadcast %268 : vector<1x128xf32> to vector<8x128xf32>
    %271 = arith.addf %269, %270 : vector<8x128xf32>
    %c26 = arith.constant 26 : index
    %272 = memref.load %arg5[%c26] : memref<32xf32, #tpu.memory_space<smem>>
    %273 = math.tanh %271 : vector<8x128xf32>
    %274 = vector.broadcast %272 : f32 to vector<8x128xf32>
    %275 = arith.mulf %274, %273 : vector<8x128xf32>
    %276 = arith.addf %266, %275 : vector<8x128xf32>
    %277 = vector.extract_strided_slice %3 {offsets = [0, 27], sizes = [8, 1], strides = [1, 1]} : vector<8x32xf32> to vector<8x1xf32>
    %278 = vector.extract_strided_slice %4 {offsets = [27, 0], sizes = [1, 128], strides = [1, 1]} : vector<32x128xf32> to vector<1x128xf32>
    %279 = vector.broadcast %277 : vector<8x1xf32> to vector<8x128xf32>
    %280 = vector.broadcast %278 : vector<1x128xf32> to vector<8x128xf32>
    %281 = arith.addf %279, %280 : vector<8x128xf32>
    %c27 = arith.constant 27 : index
    %282 = memref.load %arg5[%c27] : memref<32xf32, #tpu.memory_space<smem>>
    %283 = math.tanh %281 : vector<8x128xf32>
    %284 = vector.broadcast %282 : f32 to vector<8x128xf32>
    %285 = arith.mulf %284, %283 : vector<8x128xf32>
    %286 = arith.addf %276, %285 : vector<8x128xf32>
    %287 = vector.extract_strided_slice %3 {offsets = [0, 28], sizes = [8, 1], strides = [1, 1]} : vector<8x32xf32> to vector<8x1xf32>
    %288 = vector.extract_strided_slice %4 {offsets = [28, 0], sizes = [1, 128], strides = [1, 1]} : vector<32x128xf32> to vector<1x128xf32>
    %289 = vector.broadcast %287 : vector<8x1xf32> to vector<8x128xf32>
    %290 = vector.broadcast %288 : vector<1x128xf32> to vector<8x128xf32>
    %291 = arith.addf %289, %290 : vector<8x128xf32>
    %c28 = arith.constant 28 : index
    %292 = memref.load %arg5[%c28] : memref<32xf32, #tpu.memory_space<smem>>
    %293 = math.tanh %291 : vector<8x128xf32>
    %294 = vector.broadcast %292 : f32 to vector<8x128xf32>
    %295 = arith.mulf %294, %293 : vector<8x128xf32>
    %296 = arith.addf %286, %295 : vector<8x128xf32>
    %297 = vector.extract_strided_slice %3 {offsets = [0, 29], sizes = [8, 1], strides = [1, 1]} : vector<8x32xf32> to vector<8x1xf32>
    %298 = vector.extract_strided_slice %4 {offsets = [29, 0], sizes = [1, 128], strides = [1, 1]} : vector<32x128xf32> to vector<1x128xf32>
    %299 = vector.broadcast %297 : vector<8x1xf32> to vector<8x128xf32>
    %300 = vector.broadcast %298 : vector<1x128xf32> to vector<8x128xf32>
    %301 = arith.addf %299, %300 : vector<8x128xf32>
    %c29 = arith.constant 29 : index
    %302 = memref.load %arg5[%c29] : memref<32xf32, #tpu.memory_space<smem>>
    %303 = math.tanh %301 : vector<8x128xf32>
    %304 = vector.broadcast %302 : f32 to vector<8x128xf32>
    %305 = arith.mulf %304, %303 : vector<8x128xf32>
    %306 = arith.addf %296, %305 : vector<8x128xf32>
    %307 = vector.extract_strided_slice %3 {offsets = [0, 30], sizes = [8, 1], strides = [1, 1]} : vector<8x32xf32> to vector<8x1xf32>
    %308 = vector.extract_strided_slice %4 {offsets = [30, 0], sizes = [1, 128], strides = [1, 1]} : vector<32x128xf32> to vector<1x128xf32>
    %309 = vector.broadcast %307 : vector<8x1xf32> to vector<8x128xf32>
    %310 = vector.broadcast %308 : vector<1x128xf32> to vector<8x128xf32>
    %311 = arith.addf %309, %310 : vector<8x128xf32>
    %c30 = arith.constant 30 : index
    %312 = memref.load %arg5[%c30] : memref<32xf32, #tpu.memory_space<smem>>
    %313 = math.tanh %311 : vector<8x128xf32>
    %314 = vector.broadcast %312 : f32 to vector<8x128xf32>
    %315 = arith.mulf %314, %313 : vector<8x128xf32>
    %316 = arith.addf %306, %315 : vector<8x128xf32>
    %317 = vector.extract_strided_slice %3 {offsets = [0, 31], sizes = [8, 1], strides = [1, 1]} : vector<8x32xf32> to vector<8x1xf32>
    %318 = vector.extract_strided_slice %4 {offsets = [31, 0], sizes = [1, 128], strides = [1, 1]} : vector<32x128xf32> to vector<1x128xf32>
    %319 = vector.broadcast %317 : vector<8x1xf32> to vector<8x128xf32>
    %320 = vector.broadcast %318 : vector<1x128xf32> to vector<8x128xf32>
    %321 = arith.addf %319, %320 : vector<8x128xf32>
    %c31 = arith.constant 31 : index
    %322 = memref.load %arg5[%c31] : memref<32xf32, #tpu.memory_space<smem>>
    %323 = math.tanh %321 : vector<8x128xf32>
    %324 = vector.broadcast %322 : f32 to vector<8x128xf32>
    %325 = arith.mulf %324, %323 : vector<8x128xf32>
    %326 = arith.addf %316, %325 : vector<8x128xf32>
    %c0_7 = arith.constant 0 : index
    %c0_8 = arith.constant 0 : index
    %327 = vector.load %arg7[%c0_7, %c0_8] : memref<8x128xf32, #tpu.memory_space<vmem>>, vector<8x128xf32>
    %328 = vector.broadcast %5 : vector<1x128xf32> to vector<8x128xf32>
    %329 = arith.mulf %326, %328 : vector<8x128xf32>
    %330 = arith.addf %327, %329 : vector<8x128xf32>
    %c0_9 = arith.constant 0 : index
    %c0_10 = arith.constant 0 : index
    %331 = vector.load %arg7[%c0_9, %c0_10] : memref<8x128xf32, #tpu.memory_space<vmem>>, vector<8x128xf32>
    tpu.vector_store %arg7[%c0_9, %c0_10], %330 {strides = array<i32>} : memref<8x128xf32, #tpu.memory_space<vmem>>, vector<8x128xf32>,
    %c1_i32 = arith.constant 1 : i32
    %332 = arith.cmpi eq, %arg1, %c1_i32 : i32
    %333 = arith.extui %332 : i1 to i32
    %c0_i32_11 = arith.constant 0 : i32
    %334 = arith.cmpi ne, %333, %c0_i32_11 : i32
    scf.if %334 {
      %c0_12 = arith.constant 0 : index
      %c0_13 = arith.constant 0 : index
      %335 = vector.load %arg7[%c0_12, %c0_13] : memref<8x128xf32, #tpu.memory_space<vmem>>, vector<8x128xf32>
      %cst_14 = arith.constant dense<0.000000e+00> : vector<8xf32>
      %336 = vector.multi_reduction <add>, %335, %cst_14 [1] : vector<8x128xf32> to vector<8xf32>
      %337 = vector.shape_cast %336 : vector<8xf32> to vector<8x1xf32>
      %c0_15 = arith.constant 0 : index
      %c0_16 = arith.constant 0 : index
      %338 = vector.load %arg6[%c0_15, %c0_16] : memref<8x1xf32, #tpu.memory_space<vmem>>, vector<8x1xf32>
      tpu.vector_store %arg6[%c0_15, %c0_16], %337 {strides = array<i32>} : memref<8x1xf32, #tpu.memory_space<vmem>>, vector<8x1xf32>,
    } else {
    }
    return
  }
  func.func @transform_0(%arg0: i32, %arg1: i32) -> (i32, i32) {
    %c0_i32 = arith.constant 0 : i32
    %c0_i32_0 = arith.constant 0 : i32
    return %arg0, %c0_i32 : i32, i32
  }
  func.func @transform_1(%arg0: i32, %arg1: i32) -> (i32, i32) {
    %c0_i32 = arith.constant 0 : i32
    %c0_i32_0 = arith.constant 0 : i32
    return %c0_i32, %arg1 : i32, i32
  }
  func.func @transform_2(%arg0: i32, %arg1: i32) -> (i32, i32) {
    %c0_i32 = arith.constant 0 : i32
    %c0_i32_0 = arith.constant 0 : i32
    return %c0_i32, %arg1 : i32, i32
  }
  func.func @transform_3(%arg0: i32, %arg1: i32) -> i32 {
    %c0_i32 = arith.constant 0 : i32
    %c0_i32_0 = arith.constant 0 : i32
    return %c0_i32 : i32
  }
  func.func @transform_4(%arg0: i32, %arg1: i32) -> (i32, i32) {
    %c0_i32 = arith.constant 0 : i32
    %c0_i32_0 = arith.constant 0 : i32
    return %arg0, %c0_i32 : i32, i32
  }
}

</mosaic_0001>

<llo_original>
// kernel: tpu_custom_call.1
$region0: #{tpu_custom_call.1}
  #allocation0 [shape = 'u32[]', space=smem, size = 0x4, offset = 0x4, fixed_abs, tag = 'smem constant byte address 0x4 - core index']
  #allocation1 [shape = 'u32[144,128]{1,0:T(1,128)}', space=vmem, size = 0x12000, scoped, tag = 'internal scratch']
  #allocation2 [shape = 'f32[8,128]{1,0:T(8,128)}', space=vmem, size = 0x1000, scoped, tag = 'scratch operand']
  %s0 = inlined_call_operand.hbm [shape: f32[16,32], index: 0, kind: input, shape index: {}]
  %s1 = inlined_call_operand.hbm [shape: f32[32,256], index: 1, kind: input, shape index: {}]
  %s2 = inlined_call_operand.vmem [shape: f32[1,256], index: 2, kind: input, shape index: {}]
  %s3 = inlined_call_operand.vmem [shape: f32[32], index: 3, kind: input, shape index: {}]
  %s4 = inlined_call_operand.vmem [shape: f32[16,1], index: 4, kind: output, shape index: {}]
  %s5 = sld [smem:[#allocation0]]
  $region69: #{tpu_custom_call.1} parent=0
    _
  %s7 = ssub.s32 1, %s5
  %s8 = scalar_select 0, %s7, %s5
  $region1: #{tpu_custom_call.1} parent=0
    #allocation3 [shape = 'u8[8192]{0}', space=vmem, size = 0x2000, scoped, tag = 'input window, operand 0']
    #allocation4 [shape = 's32[2]{0}', space=sflag, size = 0x8, scoped, tag = 'scoped memory for tpu_custom_call.1']
    #allocation5 [shape = 's32[2]{0}', space=sflag, size = 0x8, scoped, tag = 'scoped memory for tpu_custom_call.1']
    #allocation6 [shape = 'u8[32768]{0}', space=vmem, size = 0x8000, scoped, tag = 'input window, operand 1']
    #allocation7 [shape = 's32[2]{0}', space=sflag, size = 0x8, scoped, tag = 'scoped memory for tpu_custom_call.1']
    #allocation8 [shape = 'u8[512]{0}', space=smem, size = 0x200, scoped, tag = 'input window, operand 3, single buffered']
    %9 = vsyncpa [#allocation4], 0
    %s10 = scalar_lea.sflag [#allocation4], 1
    %11 = vsyncpa %s10, 0
    %12 = vsyncpa [#allocation7], 0
    %s13 = scalar_lea.sflag [#allocation7], 1
    %14 = vsyncpa %s13, 0
    %15 = vsyncpa [#allocation5], 0
    loop: start=0, step=1, limit=6
    $region2: #{tpu_custom_call.1} parent=1 // loop_pre_header
      _
    $region3: #{tpu_custom_call.1} parent=1 // loop_header
      %s17 = sphi 0, %s21
      %p18 = scmp.ge.s32.totalorder %s17, 6
      %s24 = sphi 0, %s36
      %s25 = sphi 0, %s32
      %s26 = sphi 0, %s24
      %s27 = sphi 0, %s25
      %s28 = sphi 0, %s26
      %s29 = sphi 0, %s27
      %s39 = sphi 0, %s41
      %s42 = sphi 0, %s39
      %s43 = sphi 0, %s42
      %s59 = sphi 0, %s43
      %s65 = sphi 0, %s67
      %s68 = sphi 0, %s65
      %s69 = sphi 0, %s68
      %s85 = sphi 0, %s69
      %s91 = sphi 0, %s93
      %s94 = sphi 0, %s91
      %s95 = sphi 0, %s94
      %s111 = sphi 0, %s95
      %s115 = sphi 0, %s115
      %s117 = sphi 0, %s115
      %s118 = sphi 0, %s117
      %s132 = sphi 0, %s118
      %s138 = sphi 0, %s140
      %s141 = sphi 0, %s138
      %s142 = sphi 0, %s141
      %s158 = sphi 0, %s142
    $region4: #{tpu_custom_call.1} parent=1 // loop_header_branch
      %20 = sbr.rel (%p18) target = $region8
    $region5: #{tpu_custom_call.1} parent=1 // loop_body
      %s22 = ssub.s32 %s17, 1
      %s23 = ssub.s32 %s17, 2
      %s30 = sadd.s32 1, %s25
      %p31 = scmp.ge.s32.totalorder %s30, 2
      %s32 = scalar_select %p31, 0, %s30
      %s33 = sadd.s32 1, %s24
      %s34 = scalar_select %p31, %s33, %s24
      %p35 = scmp.ge.s32.totalorder %s34, 2
      %s36 = scalar_select %p35, 0, %s34
      %s37 = ssub.s32 %s24, %s36
      %p38 = scmp.eq.s32.totalorder %s37, 0
      %s40 = sadd.s32 %s39, 1
      %s41 = scalar_select %p38, %s39, %s40
      %p44 = pneg %p38
      %p45 = scmp.eq.s32.totalorder %s17, 3
      %p46 = por %p44, %p45
      %p47 = scmp.ne.s32.totalorder %s39, %s42
      %p48 = scmp.eq.s32.totalorder %s17, 0
      %p49 = por %p47, %p48
      %p50 = scmp.ne.s32.totalorder %s39, %s42
      %p51 = scmp.eq.s32.totalorder %s22, 3
      %p52 = por %p50, %p51
      %p53 = scmp.ne.s32.totalorder %s42, %s43
      %p54 = scmp.eq.s32.totalorder %s22, 0
      %p55 = por %p53, %p54
      %p56 = scmp.ne.s32.totalorder %s42, %s43
      %p57 = scmp.eq.s32.totalorder %s23, 3
      %p58 = por %p56, %p57
      %p60 = scmp.ne.s32.totalorder %s43, %s59
      %p61 = scmp.eq.s32.totalorder %s23, 0
      %p62 = por %p60, %p61
      %s63 = ssub.s32 %s25, %s32
      %p64 = scmp.eq.s32.totalorder %s63, 0
      %s66 = sadd.s32 %s65, 1
      %s67 = scalar_select %p64, %s65, %s66
      %p70 = pneg %p64
      %p71 = scmp.eq.s32.totalorder %s17, 3
      %p72 = por %p70, %p71
      %p73 = scmp.ne.s32.totalorder %s65, %s68
      %p74 = scmp.eq.s32.totalorder %s17, 0
      %p75 = por %p73, %p74
      %p76 = scmp.ne.s32.totalorder %s65, %s68
      %p77 = scmp.eq.s32.totalorder %s22, 3
      %p78 = por %p76, %p77
      %p79 = scmp.ne.s32.totalorder %s68, %s69
      %p80 = scmp.eq.s32.totalorder %s22, 0
      %p81 = por %p79, %p80
      %p82 = scmp.ne.s32.totalorder %s68, %s69
      %p83 = scmp.eq.s32.totalorder %s23, 3
      %p84 = por %p82, %p83
      %p86 = scmp.ne.s32.totalorder %s69, %s85
      %p87 = scmp.eq.s32.totalorder %s23, 0
      %p88 = por %p86, %p87
      %s89 = ssub.s32 %s25, %s32
      %p90 = scmp.eq.s32.totalorder %s89, 0
      %s92 = sadd.s32 %s91, 1
      %s93 = scalar_select %p90, %s91, %s92
      %p96 = pneg %p90
      %p97 = scmp.eq.s32.totalorder %s17, 3
      %p98 = por %p96, %p97
      %p99 = scmp.ne.s32.totalorder %s91, %s94
      %p100 = scmp.eq.s32.totalorder %s17, 0
      %p101 = por %p99, %p100
      %p102 = scmp.ne.s32.totalorder %s91, %s94
      %p103 = scmp.eq.s32.totalorder %s22, 3
      %p104 = por %p102, %p103
      %p105 = scmp.ne.s32.totalorder %s94, %s95
      %p106 = scmp.eq.s32.totalorder %s22, 0
      %p107 = por %p105, %p106
      %p108 = scmp.ne.s32.totalorder %s94, %s95
      %p109 = scmp.eq.s32.totalorder %s23, 3
      %p110 = por %p108, %p109
      %p112 = scmp.ne.s32.totalorder %s95, %s111
      %p113 = scmp.eq.s32.totalorder %s23, 0
      %p114 = por %p112, %p113
      %s116 = sadd.s32 %s115, 1
      %p119 = scmp.eq.s32.totalorder %s17, 3
      %p120 = scmp.ne.s32.totalorder %s115, %s117
      %p121 = scmp.eq.s32.totalorder %s17, 0
      %p122 = por %p120, %p121
      %p123 = scmp.ne.s32.totalorder %s115, %s117
      %p124 = scmp.eq.s32.totalorder %s22, 3
      %p125 = por %p123, %p124
      %p126 = scmp.ne.s32.totalorder %s117, %s118
      %p127 = scmp.eq.s32.totalorder %s22, 0
      %p128 = por %p126, %p127
      %p129 = scmp.ne.s32.totalorder %s117, %s118
      %p130 = scmp.eq.s32.totalorder %s23, 3
      %p131 = por %p129, %p130
      %p133 = scmp.ne.s32.totalorder %s118, %s132
      %p134 = scmp.eq.s32.totalorder %s23, 0
      %p135 = por %p133, %p134
      %s136 = ssub.s32 %s24, %s36
      %p137 = scmp.eq.s32.totalorder %s136, 0
      %s139 = sadd.s32 %s138, 1
      %s140 = scalar_select %p137, %s138, %s139
      %p143 = pneg %p137
      %p144 = scmp.eq.s32.totalorder %s17, 3
      %p145 = por %p143, %p144
      %p146 = scmp.ne.s32.totalorder %s138, %s141
      %p147 = scmp.eq.s32.totalorder %s17, 0
      %p148 = por %p146, %p147
      %p149 = scmp.ne.s32.totalorder %s138, %s141
      %p150 = scmp.eq.s32.totalorder %s22, 3
      %p151 = por %p149, %p150
      %p152 = scmp.ne.s32.totalorder %s141, %s142
      %p153 = scmp.eq.s32.totalorder %s22, 0
      %p154 = por %p152, %p153
      %p155 = scmp.ne.s32.totalorder %s141, %s142
      %p156 = scmp.eq.s32.totalorder %s23, 3
      %p157 = por %p155, %p156
      %p159 = scmp.ne.s32.totalorder %s142, %s158
      %p160 = scmp.eq.s32.totalorder %s23, 0
      %p161 = por %p159, %p160
      %p162 = scmp.le.s32.totalorder 1, %s17
      %p163 = scmp.lt.s32.totalorder %s17, 5
      %p164 = pnand %p162, %p163
      %p165 = pneg %p164
      // Predicated region
      $region9: #{tpu_custom_call.1} parent=5 // pred_check
        _
      $region10: #{tpu_custom_call.1} parent=5 // pred_check_branch
        %167 = sbr.rel (%p164) target = $region12
      $region11: #{tpu_custom_call.1} parent=5 // pred_region
        %s168 = ssub.s32 %s17, 1
        // Predicated region
        $region13: #{tpu_custom_call.1} parent=11 // pred_check
          %p169 = pneg %p128
        $region14: #{tpu_custom_call.1} parent=11 // pred_check_branch
          %171 = sbr.rel (%p169) target = $region16
        $region15: #{tpu_custom_call.1} parent=11 // pred_region
          %s173 = ssub.s32 16, 16
          %174 = vsyncadd [#allocation5], %s173
          %s176 = sshll.u32 %s3, 4
          %s177 = int_to_ptr.vmem [resolvable:$true] %s176
          %179 = dma.vmem_to_smem %s177, 16, [#allocation8], [#allocation5]
        $region16: #{tpu_custom_call.1} parent=11 // pred_fallthru
          _
      $region12: #{tpu_custom_call.1} parent=5 // pred_fallthru
        _
      %p180 = scmp.lt.s32.totalorder %s17, 4
      // Predicated region
      $region17: #{tpu_custom_call.1} parent=5 // pred_check
        %p181 = pneg %p180
      $region18: #{tpu_custom_call.1} parent=5 // pred_check_branch
        %183 = sbr.rel (%p181) target = $region20
      $region19: #{tpu_custom_call.1} parent=5 // pred_region
        // Predicated region
        $region21: #{tpu_custom_call.1} parent=19 // pred_check
          %p184 = pneg %p49
        $region22: #{tpu_custom_call.1} parent=19 // pred_check_branch
          %186 = sbr.rel (%p184) target = $region24
        $region23: #{tpu_custom_call.1} parent=19 // pred_region
          %s187 = sand.u32 %s39, 1
          %s188 = scalar_lea.sflag [#allocation4], %s187
          %s189 = sand.u32 %s39, 1
          %s190 = smul.addr %s189, 8
          %s191 = scalar_lea.vmem [#allocation3], %s190
          %s193 = ssub.s32 128, 128
          %194 = vsyncadd %s188, %s193
          %s195 = smul.addr %s24, 128
          %s196 = scalar_lea.hbm %s0, %s195
          %s198 = sshll.u32 %s191, 4
          %s199 = int_to_ptr.vmem [resolvable:$true] %s198
          %201 = dma.hbm_to_vmem [thread:$0]  %s196, 128, %s199, %s188
        $region24: #{tpu_custom_call.1} parent=19 // pred_fallthru
          _
        // Predicated region
        $region25: #{tpu_custom_call.1} parent=19 // pred_check
          %p202 = pneg %p75
        $region26: #{tpu_custom_call.1} parent=19 // pred_check_branch
          %204 = sbr.rel (%p202) target = $region28
        $region27: #{tpu_custom_call.1} parent=19 // pred_region
          %s205 = sand.u32 %s65, 1
          %s206 = scalar_lea.sflag [#allocation7], %s205
          %s207 = sand.u32 %s65, 1
          %s208 = smul.addr %s207, 32
          %s209 = scalar_lea.vmem [#allocation6], %s208
          %s211 = ssub.s32 512, 512
          %212 = vsyncadd %s206, %s211
          %s213 = smul.addr %s25, 128
          %s214 = scalar_lea.hbm %s1, %s213
          %s215 = sshll.u32 %s209, 4
          %s216 = int_to_ptr.vmem [resolvable:$true] %s215
          %221 = dma.hbm_to_vmem [thread:$0]  %s214, 512, %s216, %s206, 256, 128, 8
        $region28: #{tpu_custom_call.1} parent=19 // pred_fallthru
          _
        // Predicated region
        $region29: #{tpu_custom_call.1} parent=19 // pred_check
          %p222 = pneg %p101
        $region30: #{tpu_custom_call.1} parent=19 // pred_check_branch
          %224 = sbr.rel (%p222) target = $region32
        $region31: #{tpu_custom_call.1} parent=19 // pred_region
          %p225 = scmp.lt.s32.totalorder %s25, 1
          %s226 = scalar_select %p225, %s25, 1
          %s227 = scalar_lea.vmem %s2, %s226
        $region32: #{tpu_custom_call.1} parent=19 // pred_fallthru
          _
      $region20: #{tpu_custom_call.1} parent=5 // pred_fallthru
        _
      %p228 = scmp.le.s32.totalorder 1, %s17
      %p229 = scmp.lt.s32.totalorder %s17, 5
      %p230 = pnand %p228, %p229
      %p231 = pneg %p230
      // Predicated region
      $region33: #{tpu_custom_call.1} parent=5 // pred_check
        _
      $region34: #{tpu_custom_call.1} parent=5 // pred_check_branch
        %233 = sbr.rel (%p230) target = $region36
      $region35: #{tpu_custom_call.1} parent=5 // pred_region
        %s234 = ssub.s32 %s17, 1
        %s235 = sand.u32 %s42, 1
        %s236 = scalar_lea.sflag [#allocation4], %s235
        %s237 = sand.u32 %s42, 1
        %s238 = smul.addr %s237, 8
        %s239 = scalar_lea.vmem [#allocation3], %s238
        // Predicated region
        $region37: #{tpu_custom_call.1} parent=35 // pred_check
          %p240 = pneg %p55
        $region38: #{tpu_custom_call.1} parent=35 // pred_check_branch
          %242 = sbr.rel (%p240) target = $region40
        $region39: #{tpu_custom_call.1} parent=35 // pred_region
          %243 = dma.done %s236, 128
        $region40: #{tpu_custom_call.1} parent=35 // pred_fallthru
          _
        %s244 = sand.u32 %s68, 1
        %s245 = scalar_lea.sflag [#allocation7], %s244
        %s246 = sand.u32 %s68, 1
        %s247 = smul.addr %s246, 32
        %s248 = scalar_lea.vmem [#allocation6], %s247
        // Predicated region
        $region41: #{tpu_custom_call.1} parent=35 // pred_check
          %p249 = pneg %p81
        $region42: #{tpu_custom_call.1} parent=35 // pred_check_branch
          %251 = sbr.rel (%p249) target = $region44
        $region43: #{tpu_custom_call.1} parent=35 // pred_region
          %252 = dma.done %s245, 512
        $region44: #{tpu_custom_call.1} parent=35 // pred_fallthru
          _
        // Predicated region
        $region45: #{tpu_custom_call.1} parent=35 // pred_check
          %p253 = pneg %p128
        $region46: #{tpu_custom_call.1} parent=35 // pred_check_branch
          %255 = sbr.rel (%p253) target = $region48
        $region47: #{tpu_custom_call.1} parent=35 // pred_region
          %256 = dma.done [#allocation5], 16
        $region48: #{tpu_custom_call.1} parent=35 // pred_fallthru
          _
        %257 = sfence
        %s258 = sand.u32 %s42, 1
        %s259 = scalar_lea.sflag [#allocation4], %s258
        %s260 = sand.u32 %s42, 1
        %s261 = smul.addr %s260, 8
        %s262 = scalar_lea.vmem [#allocation3], %s261
        %p263 = pneg %p55
        %p264 = pneg %p52
        %s265 = sand.u32 %s68, 1
        %s266 = scalar_lea.sflag [#allocation7], %s265
        %s267 = sand.u32 %s68, 1
        %s268 = smul.addr %s267, 32
        %s269 = scalar_lea.vmem [#allocation6], %s268
        %p270 = pneg %p81
        %p271 = pneg %p78
        %p272 = scmp.lt.s32.totalorder %s27, 1
        %s273 = scalar_select %p272, %s27, 1
        %s274 = scalar_lea.vmem %s2, %s273
        %p275 = pneg %p107
        %p276 = pneg %p104
        %p277 = pneg %p128
        %p278 = pneg %p125
        %p279 = pneg %p154
        %p280 = pneg %p151
        %p281 = scmp.lt.s32.totalorder %s26, 1
        %s282 = scalar_select %p281, %s26, 1
        %s283 = smul.addr %s282, 8
        %s284 = scalar_lea.vmem %s4, %s283
        %p285 = scmp.lt.s32.totalorder %s27, 1
        %s286 = scalar_select %p285, %s27, 1
        %s287 = scalar_lea.vmem %s2, %s286
        %p288 = scmp.lt.s32.totalorder %s26, 1
        %s289 = scalar_select %p288, %s26, 1
        %s290 = smul.addr %s289, 8
        %s291 = scalar_lea.vmem %s4, %s290
        %p292 = scmp.eq.s32.totalorder %s27, 0
        // Predicated region
        $region49: #{tpu_custom_call.1} parent=35 // pred_check
          %p293 = pneg %p292
        $region50: #{tpu_custom_call.1} parent=35 // pred_check_branch
          %295 = sbr.rel (%p293) target = $region52
        $region51: #{tpu_custom_call.1} parent=35 // pred_region
          %296 = vst [vmem:[#allocation2] sm:$0xff] 0.0
        $region52: #{tpu_custom_call.1} parent=35 // pred_fallthru
          _
        %v297 = vld [vmem:[%s239] sm:$0xff]
        %v298 = vld [vmem:[%s248] sm:$0xff]
        %v299 = vld [vmem:[%s248 + $0x8] sm:$0xff]
        %v300 = vld [vmem:[%s248 + $0x10] sm:$0xff]
        %v301 = vld [vmem:[%s248 + $0x18] sm:$0xff]
        %v302 = vld [vmem:[%s287] sm:$0x1]
        %304 = vset.pattern.permute.xlu0 0
        %305 = vperm.xlu0 %304, %v297
        %v306 = vpop.permute.xlu0 %305
        %v308 = vlaneseq
        %v309 = vshrl.u32 %v308, 7
        %v310 = vsub.s32 0, %v309
        %v311 = vrot.slane %v298, %v310
        %v312 = vadd.f32 %v306, %v311
        %s313 = sld [smem:[#allocation8]]
        %v314 = vtanh.pop %v312
        %v315 = vstv %s313
        %v316 = vmul.f32 %v315, %v314
        %v317 = vadd.f32 %v316, 0.0
        %318 = vset.pattern.permute.xlu0 1
        %319 = vperm.xlu0 %318, %v297
        %v320 = vpop.permute.xlu0 %319
        %v322 = vlaneseq
        %v323 = vshrl.u32 %v322, 7
        %v324 = vsub.s32 1, %v323
        %v325 = vrot.slane %v298, %v324
        %v326 = vadd.f32 %v320, %v325
        %s327 = sld [smem:[#allocation8 + $0x1]]
        %v328 = vtanh.pop %v326
        %v329 = vstv %s327
        %v330 = vmul.f32 %v329, %v328
        %v331 = vadd.f32 %v317, %v330
        %332 = vset.pattern.permute.xlu0 2
        %333 = vperm.xlu0 %332, %v297
        %v334 = vpop.permute.xlu0 %333
        %v336 = vlaneseq
        %v337 = vshrl.u32 %v336, 7
        %v338 = vsub.s32 2, %v337
        %v339 = vrot.slane %v298, %v338
        %v340 = vadd.f32 %v334, %v339
        %s341 = sld [smem:[#allocation8 + $0x2]]
        %v342 = vtanh.pop %v340
        %v343 = vstv %s341
        %v344 = vmul.f32 %v343, %v342
        %v345 = vadd.f32 %v331, %v344
        %346 = vset.pattern.permute.xlu0 3
        %347 = vperm.xlu0 %346, %v297
        %v348 = vpop.permute.xlu0 %347
        %v350 = vlaneseq
        %v351 = vshrl.u32 %v350, 7
        %v352 = vsub.s32 3, %v351
        %v353 = vrot.slane %v298, %v352
        %v354 = vadd.f32 %v348, %v353
        %s355 = sld [smem:[#allocation8 + $0x3]]
        %v356 = vtanh.pop %v354
        %v357 = vstv %s355
        %v358 = vmul.f32 %v357, %v356
        %v359 = vadd.f32 %v345, %v358
        %360 = vset.pattern.permute.xlu0 4
        %361 = vperm.xlu0 %360, %v297
        %v362 = vpop.permute.xlu0 %361
        %v364 = vlaneseq
        %v365 = vshrl.u32 %v364, 7
        %v366 = vsub.s32 4, %v365
        %v367 = vrot.slane %v298, %v366
        %v368 = vadd.f32 %v362, %v367
        %s369 = sld [smem:[#allocation8 + $0x4]]
        %v370 = vtanh.pop %v368
        %v371 = vstv %s369
        %v372 = vmul.f32 %v371, %v370
        %v373 = vadd.f32 %v359, %v372
        %374 = vset.pattern.permute.xlu0 5
        %375 = vperm.xlu0 %374, %v297
        %v376 = vpop.permute.xlu0 %375
        %v378 = vlaneseq
        %v379 = vshrl.u32 %v378, 7
        %v380 = vsub.s32 5, %v379
        %v381 = vrot.slane %v298, %v380
        %v382 = vadd.f32 %v376, %v381
        %s383 = sld [smem:[#allocation8 + $0x5]]
        %v384 = vtanh.pop %v382
        %v385 = vstv %s383
        %v386 = vmul.f32 %v385, %v384
        %v387 = vadd.f32 %v373, %v386
        %388 = vset.pattern.permute.xlu0 6
        %389 = vperm.xlu0 %388, %v297
        %v390 = vpop.permute.xlu0 %389
        %v392 = vlaneseq
        %v393 = vshrl.u32 %v392, 7
        %v394 = vsub.s32 6, %v393
        %v395 = vrot.slane %v298, %v394
        %v396 = vadd.f32 %v390, %v395
        %s397 = sld [smem:[#allocation8 + $0x6]]
        %v398 = vtanh.pop %v396
        %v399 = vstv %s397
        %v400 = vmul.f32 %v399, %v398
        %v401 = vadd.f32 %v387, %v400
        %402 = vset.pattern.permute.xlu0 7
        %403 = vperm.xlu0 %402, %v297
        %v404 = vpop.permute.xlu0 %403
        %v406 = vlaneseq
        %v407 = vshrl.u32 %v406, 7
        %v408 = vsub.s32 7, %v407
        %v409 = vrot.slane %v298, %v408
        %v410 = vadd.f32 %v404, %v409
        %s411 = sld [smem:[#allocation8 + $0x7]]
        %v412 = vtanh.pop %v410
        %v413 = vstv %s411
        %v414 = vmul.f32 %v413, %v412
        %v415 = vadd.f32 %v401, %v414
        %416 = vset.pattern.permute.xlu0 8
        %417 = vperm.xlu0 %416, %v297
        %v418 = vpop.permute.xlu0 %417
        %v420 = vlaneseq
        %v421 = vshrl.u32 %v420, 7
        %v422 = vsub.s32 0, %v421
        %v423 = vrot.slane %v299, %v422
        %v424 = vadd.f32 %v418, %v423
        %s425 = sld [smem:[#allocation8 + $0x8]]
        %v426 = vtanh.pop %v424
        %v427 = vstv %s425
        %v428 = vmul.f32 %v427, %v426
        %v429 = vadd.f32 %v415, %v428
        %430 = vset.pattern.permute.xlu0 9
        %431 = vperm.xlu0 %430, %v297
        %v432 = vpop.permute.xlu0 %431
        %v434 = vlaneseq
        %v435 = vshrl.u32 %v434, 7
        %v436 = vsub.s32 1, %v435
        %v437 = vrot.slane %v299, %v436
        %v438 = vadd.f32 %v432, %v437
        %s439 = sld [smem:[#allocation8 + $0x9]]
        %v440 = vtanh.pop %v438
        %v441 = vstv %s439
        %v442 = vmul.f32 %v441, %v440
        %v443 = vadd.f32 %v429, %v442
        %444 = vset.pattern.permute.xlu0 10
        %445 = vperm.xlu0 %444, %v297
        %v446 = vpop.permute.xlu0 %445
        %v448 = vlaneseq
        %v449 = vshrl.u32 %v448, 7
        %v450 = vsub.s32 2, %v449
        %v451 = vrot.slane %v299, %v450
        %v452 = vadd.f32 %v446, %v451
        %s453 = sld [smem:[#allocation8 + $0xa]]
        %v454 = vtanh.pop %v452
        %v455 = vstv %s453
        %v456 = vmul.f32 %v455, %v454
        %v457 = vadd.f32 %v443, %v456
        %458 = vset.pattern.permute.xlu0 11
        %459 = vperm.xlu0 %458, %v297
        %v460 = vpop.permute.xlu0 %459
        %v462 = vlaneseq
        %v463 = vshrl.u32 %v462, 7
        %v464 = vsub.s32 3, %v463
        %v465 = vrot.slane %v299, %v464
        %v466 = vadd.f32 %v460, %v465
        %s467 = sld [smem:[#allocation8 + $0xb]]
        %v468 = vtanh.pop %v466
        %v469 = vstv %s467
        %v470 = vmul.f32 %v469, %v468
        %v471 = vadd.f32 %v457, %v470
        %472 = vset.pattern.permute.xlu0 12
        %473 = vperm.xlu0 %472, %v297
        %v474 = vpop.permute.xlu0 %473
        %v476 = vlaneseq
        %v477 = vshrl.u32 %v476, 7
        %v478 = vsub.s32 4, %v477
        %v479 = vrot.slane %v299, %v478
        %v480 = vadd.f32 %v474, %v479
        %s481 = sld [smem:[#allocation8 + $0xc]]
        %v482 = vtanh.pop %v480
        %v483 = vstv %s481
        %v484 = vmul.f32 %v483, %v482
        %v485 = vadd.f32 %v471, %v484
        %486 = vset.pattern.permute.xlu0 13
        %487 = vperm.xlu0 %486, %v297
        %v488 = vpop.permute.xlu0 %487
        %v490 = vlaneseq
        %v491 = vshrl.u32 %v490, 7
        %v492 = vsub.s32 5, %v491
        %v493 = vrot.slane %v299, %v492
        %v494 = vadd.f32 %v488, %v493
        %s495 = sld [smem:[#allocation8 + $0xd]]
        %v496 = vtanh.pop %v494
        %v497 = vstv %s495
        %v498 = vmul.f32 %v497, %v496
        %v499 = vadd.f32 %v485, %v498
        %500 = vset.pattern.permute.xlu0 14
        %501 = vperm.xlu0 %500, %v297
        %v502 = vpop.permute.xlu0 %501
        %v504 = vlaneseq
        %v505 = vshrl.u32 %v504, 7
        %v506 = vsub.s32 6, %v505
        %v507 = vrot.slane %v299, %v506
        %v508 = vadd.f32 %v502, %v507
        %s509 = sld [smem:[#allocation8 + $0xe]]
        %v510 = vtanh.pop %v508
        %v511 = vstv %s509
        %v512 = vmul.f32 %v511, %v510
        %v513 = vadd.f32 %v499, %v512
        %514 = vset.pattern.permute.xlu0 15
        %515 = vperm.xlu0 %514, %v297
        %v516 = vpop.permute.xlu0 %515
        %v518 = vlaneseq
        %v519 = vshrl.u32 %v518, 7
        %v520 = vsub.s32 7, %v519
        %v521 = vrot.slane %v299, %v520
        %v522 = vadd.f32 %v516, %v521
        %s523 = sld [smem:[#allocation8 + $0xf]]
        %v524 = vtanh.pop %v522
        %v525 = vstv %s523
        %v526 = vmul.f32 %v525, %v524
        %v527 = vadd.f32 %v513, %v526
        %528 = vset.pattern.permute.xlu0 16
        %529 = vperm.xlu0 %528, %v297
        %v530 = vpop.permute.xlu0 %529
        %v532 = vlaneseq
        %v533 = vshrl.u32 %v532, 7
        %v534 = vsub.s32 0, %v533
        %v535 = vrot.slane %v300, %v534
        %v536 = vadd.f32 %v530, %v535
        %s537 = sld [smem:[#allocation8 + $0x10]]
        %v538 = vtanh.pop %v536
        %v539 = vstv %s537
        %v540 = vmul.f32 %v539, %v538
        %v541 = vadd.f32 %v527, %v540
        %542 = vset.pattern.permute.xlu0 17
        %543 = vperm.xlu0 %542, %v297
        %v544 = vpop.permute.xlu0 %543
        %v546 = vlaneseq
        %v547 = vshrl.u32 %v546, 7
        %v548 = vsub.s32 1, %v547
        %v549 = vrot.slane %v300, %v548
        %v550 = vadd.f32 %v544, %v549
        %s551 = sld [smem:[#allocation8 + $0x11]]
        %v552 = vtanh.pop %v550
        %v553 = vstv %s551
        %v554 = vmul.f32 %v553, %v552
        %v555 = vadd.f32 %v541, %v554
        %556 = vset.pattern.permute.xlu0 18
        %557 = vperm.xlu0 %556, %v297
        %v558 = vpop.permute.xlu0 %557
        %v560 = vlaneseq
        %v561 = vshrl.u32 %v560, 7
        %v562 = vsub.s32 2, %v561
        %v563 = vrot.slane %v300, %v562
        %v564 = vadd.f32 %v558, %v563
        %s565 = sld [smem:[#allocation8 + $0x12]]
        %v566 = vtanh.pop %v564
        %v567 = vstv %s565
        %v568 = vmul.f32 %v567, %v566
        %v569 = vadd.f32 %v555, %v568
        %570 = vset.pattern.permute.xlu0 19
        %571 = vperm.xlu0 %570, %v297
        %v572 = vpop.permute.xlu0 %571
        %v574 = vlaneseq
        %v575 = vshrl.u32 %v574, 7
        %v576 = vsub.s32 3, %v575
        %v577 = vrot.slane %v300, %v576
        %v578 = vadd.f32 %v572, %v577
        %s579 = sld [smem:[#allocation8 + $0x13]]
        %v580 = vtanh.pop %v578
        %v581 = vstv %s579
        %v582 = vmul.f32 %v581, %v580
        %v583 = vadd.f32 %v569, %v582
        %584 = vset.pattern.permute.xlu0 20
        %585 = vperm.xlu0 %584, %v297
        %v586 = vpop.permute.xlu0 %585
        %v588 = vlaneseq
        %v589 = vshrl.u32 %v588, 7
        %v590 = vsub.s32 4, %v589
        %v591 = vrot.slane %v300, %v590
        %v592 = vadd.f32 %v586, %v591
        %s593 = sld [smem:[#allocation8 + $0x14]]
        %v594 = vtanh.pop %v592
        %v595 = vstv %s593
        %v596 = vmul.f32 %v595, %v594
        %v597 = vadd.f32 %v583, %v596
        %598 = vset.pattern.permute.xlu0 21
        %599 = vperm.xlu0 %598, %v297
        %v600 = vpop.permute.xlu0 %599
        %v602 = vlaneseq
        %v603 = vshrl.u32 %v602, 7
        %v604 = vsub.s32 5, %v603
        %v605 = vrot.slane %v300, %v604
        %v606 = vadd.f32 %v600, %v605
        %s607 = sld [smem:[#allocation8 + $0x15]]
        %v608 = vtanh.pop %v606
        %v609 = vstv %s607
        %v610 = vmul.f32 %v609, %v608
        %v611 = vadd.f32 %v597, %v610
        %612 = vset.pattern.permute.xlu0 22
        %613 = vperm.xlu0 %612, %v297
        %v614 = vpop.permute.xlu0 %613
        %v616 = vlaneseq
        %v617 = vshrl.u32 %v616, 7
        %v618 = vsub.s32 6, %v617
        %v619 = vrot.slane %v300, %v618
        %v620 = vadd.f32 %v614, %v619
        %s621 = sld [smem:[#allocation8 + $0x16]]
        %v622 = vtanh.pop %v620
        %v623 = vstv %s621
        %v624 = vmul.f32 %v623, %v622
        %v625 = vadd.f32 %v611, %v624
        %626 = vset.pattern.permute.xlu0 23
        %627 = vperm.xlu0 %626, %v297
        %v628 = vpop.permute.xlu0 %627
        %v630 = vlaneseq
        %v631 = vshrl.u32 %v630, 7
        %v632 = vsub.s32 7, %v631
        %v633 = vrot.slane %v300, %v632
        %v634 = vadd.f32 %v628, %v633
        %s635 = sld [smem:[#allocation8 + $0x17]]
        %v636 = vtanh.pop %v634
        %v637 = vstv %s635
        %v638 = vmul.f32 %v637, %v636
        %v639 = vadd.f32 %v625, %v638
        %640 = vset.pattern.permute.xlu0 24
        %641 = vperm.xlu0 %640, %v297
        %v642 = vpop.permute.xlu0 %641
        %v644 = vlaneseq
        %v645 = vshrl.u32 %v644, 7
        %v646 = vsub.s32 0, %v645
        %v647 = vrot.slane %v301, %v646
        %v648 = vadd.f32 %v642, %v647
        %s649 = sld [smem:[#allocation8 + $0x18]]
        %v650 = vtanh.pop %v648
        %v651 = vstv %s649
        %v652 = vmul.f32 %v651, %v650
        %v653 = vadd.f32 %v639, %v652
        %654 = vset.pattern.permute.xlu0 25
        %655 = vperm.xlu0 %654, %v297
        %v656 = vpop.permute.xlu0 %655
        %v658 = vlaneseq
        %v659 = vshrl.u32 %v658, 7
        %v660 = vsub.s32 1, %v659
        %v661 = vrot.slane %v301, %v660
        %v662 = vadd.f32 %v656, %v661
        %s663 = sld [smem:[#allocation8 + $0x19]]
        %v664 = vtanh.pop %v662
        %v665 = vstv %s663
        %v666 = vmul.f32 %v665, %v664
        %v667 = vadd.f32 %v653, %v666
        %668 = vset.pattern.permute.xlu0 26
        %669 = vperm.xlu0 %668, %v297
        %v670 = vpop.permute.xlu0 %669
        %v672 = vlaneseq
        %v673 = vshrl.u32 %v672, 7
        %v674 = vsub.s32 2, %v673
        %v675 = vrot.slane %v301, %v674
        %v676 = vadd.f32 %v670, %v675
        %s677 = sld [smem:[#allocation8 + $0x1a]]
        %v678 = vtanh.pop %v676
        %v679 = vstv %s677
        %v680 = vmul.f32 %v679, %v678
        %v681 = vadd.f32 %v667, %v680
        %682 = vset.pattern.permute.xlu0 27
        %683 = vperm.xlu0 %682, %v297
        %v684 = vpop.permute.xlu0 %683
        %v686 = vlaneseq
        %v687 = vshrl.u32 %v686, 7
        %v688 = vsub.s32 3, %v687
        %v689 = vrot.slane %v301, %v688
        %v690 = vadd.f32 %v684, %v689
        %s691 = sld [smem:[#allocation8 + $0x1b]]
        %v692 = vtanh.pop %v690
        %v693 = vstv %s691
        %v694 = vmul.f32 %v693, %v692
        %v695 = vadd.f32 %v681, %v694
        %696 = vset.pattern.permute.xlu0 28
        %697 = vperm.xlu0 %696, %v297
        %v698 = vpop.permute.xlu0 %697
        %v700 = vlaneseq
        %v701 = vshrl.u32 %v700, 7
        %v702 = vsub.s32 4, %v701
        %v703 = vrot.slane %v301, %v702
        %v704 = vadd.f32 %v698, %v703
        %s705 = sld [smem:[#allocation8 + $0x1c]]
        %v706 = vtanh.pop %v704
        %v707 = vstv %s705
        %v708 = vmul.f32 %v707, %v706
        %v709 = vadd.f32 %v695, %v708
        %710 = vset.pattern.permute.xlu0 29
        %711 = vperm.xlu0 %710, %v297
        %v712 = vpop.permute.xlu0 %711
        %v714 = vlaneseq
        %v715 = vshrl.u32 %v714, 7
        %v716 = vsub.s32 5, %v715
        %v717 = vrot.slane %v301, %v716
        %v718 = vadd.f32 %v712, %v717
        %s719 = sld [smem:[#allocation8 + $0x1d]]
        %v720 = vtanh.pop %v718
        %v721 = vstv %s719
        %v722 = vmul.f32 %v721, %v720
        %v723 = vadd.f32 %v709, %v722
        %724 = vset.pattern.permute.xlu0 30
        %725 = vperm.xlu0 %724, %v297
        %v726 = vpop.permute.xlu0 %725
        %v728 = vlaneseq
        %v729 = vshrl.u32 %v728, 7
        %v730 = vsub.s32 6, %v729
        %v731 = vrot.slane %v301, %v730
        %v732 = vadd.f32 %v726, %v731
        %s733 = sld [smem:[#allocation8 + $0x1e]]
        %v734 = vtanh.pop %v732
        %v735 = vstv %s733
        %v736 = vmul.f32 %v735, %v734
        %v737 = vadd.f32 %v723, %v736
        %738 = vset.pattern.permute.xlu0 31
        %739 = vperm.xlu0 %738, %v297
        %v740 = vpop.permute.xlu0 %739
        %v742 = vlaneseq
        %v743 = vshrl.u32 %v742, 7
        %v744 = vsub.s32 7, %v743
        %v745 = vrot.slane %v301, %v744
        %v746 = vadd.f32 %v740, %v745
        %s747 = sld [smem:[#allocation8 + $0x1f]]
        %v748 = vtanh.pop %v746
        %v749 = vstv %s747
        %v750 = vmul.f32 %v749, %v748
        %v751 = vadd.f32 %v737, %v750
        %v752 = vld [vmem:[#allocation2] sm:$0xff]
        %v754 = vlaneseq
        %v755 = vshrl.u32 %v754, 7
        %v756 = vsub.s32 0, %v755
        %v757 = vrot.slane %v302, %v756
        %v759 = vmul.f32 %v751, %v757
        %v760 = vadd.f32 %v752, %v759
        %761 = vst [vmem:[#allocation2] sm:$0xff] %v760
        %p762 = scmp.eq.s32.totalorder %s27, 1
        // Predicated region
        $region53: #{tpu_custom_call.1} parent=35 // pred_check
          %p763 = pneg %p762
        $region54: #{tpu_custom_call.1} parent=35 // pred_check_branch
          %765 = sbr.rel (%p763) target = $region56
        $region55: #{tpu_custom_call.1} parent=35 // pred_region
          %v766 = vld [vmem:[#allocation2] sm:$0xff]
          %767 = vadd.xlane.f32.xlu0 %v766
          %v768 = vpop.xlane.xlu0 %767
          %vm769 = vcmask 7168
          %770 = vst.msk [vmem:[%s291] sm:$0xff] %vm769, %v768
        $region56: #{tpu_custom_call.1} parent=35 // pred_fallthru
          _
        %p771 = scmp.lt.s32.totalorder %s26, 1
        %s772 = scalar_select %p771, %s26, 1
        %s773 = smul.addr %s772, 8
        %s774 = scalar_lea.vmem %s4, %s773
        // Predicated region
        $region57: #{tpu_custom_call.1} parent=35 // pred_check
          %p775 = pneg %p151
        $region58: #{tpu_custom_call.1} parent=35 // pred_check_branch
          %777 = sbr.rel (%p775) target = $region60
        $region59: #{tpu_custom_call.1} parent=35 // pred_region
          _
        $region60: #{tpu_custom_call.1} parent=35 // pred_fallthru
          _
      $region36: #{tpu_custom_call.1} parent=5 // pred_fallthru
        _
      %p778 = scmp.le.s32.totalorder 2, %s17
      // Predicated region
      $region61: #{tpu_custom_call.1} parent=5 // pred_check
        %p779 = pneg %p778
      $region62: #{tpu_custom_call.1} parent=5 // pred_check_branch
        %781 = sbr.rel (%p779) target = $region64
      $region63: #{tpu_custom_call.1} parent=5 // pred_region
        %s782 = ssub.s32 %s17, 2
        // Predicated region
        $region65: #{tpu_custom_call.1} parent=63 // pred_check
          %p783 = pneg %p157
        $region66: #{tpu_custom_call.1} parent=63 // pred_check_branch
          %785 = sbr.rel (%p783) target = $region68
        $region67: #{tpu_custom_call.1} parent=63 // pred_region
          %p786 = scmp.lt.s32.totalorder %s28, 1
          %s787 = scalar_select %p786, %s28, 1
          %s788 = smul.addr %s787, 8
          %s789 = scalar_lea.vmem %s4, %s788
        $region68: #{tpu_custom_call.1} parent=63 // pred_fallthru
          _
      $region64: #{tpu_custom_call.1} parent=5 // pred_fallthru
        _
    $region6: #{tpu_custom_call.1} parent=1 // loop_footer
      %s21 = sadd.s32 1, %s17
    $region7: #{tpu_custom_call.1} parent=1 // loop_footer_branch
      %16 = sbr.rel target = $region3
    $region8: #{tpu_custom_call.1} parent=1 // loop_exit
      _
    %790 = vsyncpa [#allocation4], 1
    %s791 = scalar_lea.sflag [#allocation4], 1
    %792 = vsyncpa %s791, 1
    %793 = vsyncpa [#allocation7], 1
    %s794 = scalar_lea.sflag [#allocation7], 1
    %795 = vsyncpa %s794, 1
    %796 = vsyncpa [#allocation5], 1
    %s797 = scalar_lea.sflag [#allocation5], 1
    %798 = vsyncpa %s797, 1

</llo_original>
